<compile_context>
chip_gen: v6e
topology: v6e:2x2x1
jax: 0.10.0
libtpu: 0.0.40
codegen_flags: <defaults>
</compile_context>

<pallas_src>
from functools import partial

import numpy as np
import jax
import jax.numpy as jnp
from jax.experimental import pallas as pl
from jax.experimental.pallas import tpu as pltpu


# bf16 fast path: when the input is bf16, stream activations and DFT weights as
# bf16 through the MXU (~3x faster on v6e/v7x, ~1e-2 rel. error).  The PyTorch
# module upcasts to f32 internally; set False to keep f32 math for bf16 inputs.
ENABLE_BF16_FASTPATH = True

_CONTRACTION_TILE = 512   # chunk size when the contraction axis is tiled


def _round_up(x, m):
    return (x + m - 1) // m * m


def _gen_params():
    """Per-generation tiling / VMEM constants (conservative for v7x / unknown)."""
    kind = ""
    try:
        kind = jax.devices()[0].device_kind.lower()
    except Exception:
        pass
    if any(g in kind for g in ("v4", "v5", "v6")):
        # 128 MiB VMEM parts: larger lane tiles, higher scoped-VMEM ceiling.
        return {"max_lane_tile": 1024, "max_contraction": 2048,
                "vmem_cap": 100 << 20}
    # v7x (64 MiB VMEM per TensorCore) or unknown backend: leave headroom.
    return {"max_lane_tile": 512, "max_contraction": 2048,
            "vmem_cap": 52 << 20}


def _weight_block_spec(shape, index_map, single_chunk):
    """Single-buffer the grid-invariant DFT matrix when its block never changes."""
    if single_chunk:
        try:
            return pl.BlockSpec(shape, index_map, pipeline_mode=pl.Buffered(1))
        except (TypeError, AttributeError):
            pass  # older Pallas without pipeline_mode: fall back to default buffering
    return pl.BlockSpec(shape, index_map)


# ----------------------------------------------------------------------------
# Kernel bodies
# ----------------------------------------------------------------------------
def _dft_kernel_single(w_ref, x_ref, o_ref):
    # Single contraction chunk: one fused MXU matmul, written straight to the
    # output in its final dtype (no accumulator round-trip, no zero-init pass).
    o_ref[...] = jnp.dot(w_ref[...], x_ref[...],
                         preferred_element_type=jnp.float32).astype(o_ref.dtype)


def _dft_kernel_acc(w_ref, x_ref, o_ref, acc_ref):
    # Tiled contraction: assign on the first step, accumulate afterwards,
    # cast out on the last step.
    part = jnp.dot(w_ref[...], x_ref[...], preferred_element_type=jnp.float32)
    c = pl.program_id(1)

    @pl.when(c == 0)
    def _():
        acc_ref[...] = part

    @pl.when(c > 0)
    def _():
        acc_ref[...] += part

    @pl.when(c == pl.num_programs(1) - 1)
    def _():
        o_ref[...] = acc_ref[...].astype(o_ref.dtype)


# ----------------------------------------------------------------------------
# Shared tiled-matmul driver
# ----------------------------------------------------------------------------
def _dft_matmul(w, x2, out_rows, out_dtype, tm, tc, params):
    """out = w @ x2 with a lane-dense resident output.

    w: (out_rows, C_pad) DFT matrix, x2: (C_pad, M_pad) merged-lane activations.
    Grid is (M_pad // tm, C_pad // tc) with the reduction axis last."""
    C_pad, M_pad = x2.shape
    n_c = C_pad // tc
    single = n_c == 1

    w_item = np.dtype(w.dtype).itemsize
    x_item = np.dtype(x2.dtype).itemsize
    o_item = np.dtype(out_dtype).itemsize
    need = ((1 if single else 2) * out_rows * tc * w_item      # DFT matrix block(s)
            + 2 * tc * tm * x_item                             # x block (double buffered)
            + 2 * out_rows * tm * o_item                       # output block
            + (0 if single else out_rows * tm * 4))            # f32 accumulator
    vmem_limit = int(min(max(int(1.25 * need) + (4 << 20), 16 << 20),
                         params["vmem_cap"]))

    in_specs = [
        _weight_block_spec((out_rows, tc), lambda m, c: (0, c), single),
        pl.BlockSpec((tc, tm), lambda m, c: (c, m)),
    ]
    out_spec = pl.BlockSpec((out_rows, tm), lambda m, c: (0, m))
    scratch = [] if single else [pltpu.VMEM((out_rows, tm), jnp.float32)]

    return pl.pallas_call(
        _dft_kernel_single if single else _dft_kernel_acc,
        out_shape=jax.ShapeDtypeStruct((out_rows, M_pad), out_dtype),
        grid_spec=pltpu.PrefetchScalarGridSpec(
            num_scalar_prefetch=0,
            grid=(M_pad // tm, n_c),
            in_specs=in_specs,
            out_specs=out_spec,
            scratch_shapes=scratch,
        ),
        compiler_params=pltpu.CompilerParams(
            dimension_semantics=("parallel", "arbitrary"),
            vmem_limit_bytes=vmem_limit),
    )(w, x2)


# ----------------------------------------------------------------------------
# Deterministic DFT matrices (padded, fused)
# ----------------------------------------------------------------------------
def _rfft_weights(T, T_pad, Kp, dtype):
    """Stacked [cos; -sin] real-DFT matrix, shape (2*Kp, T_pad)."""
    t = np.arange(T_pad, dtype=np.float64)
    k = np.arange(Kp, dtype=np.float64)
    ang = 2.0 * np.pi * np.outer(k, t) / T
    valid_t = (t < T)[None, :]
    C = np.where(valid_t, np.cos(ang), 0.0)           # real:  sum_t x[t] cos
    S = np.where(valid_t, -np.sin(ang), 0.0)          # imag: -sum_t x[t] sin
    return jnp.asarray(np.concatenate([C, S], axis=0), dtype=dtype)


def _irfft_weights(N, Np, K, K_pad, dtype):
    """Fused [A | B] inverse real-DFT matrix, shape (Np, 2*K_pad)."""
    n = np.arange(Np, dtype=np.float64)
    k = np.arange(K_pad, dtype=np.float64)
    ang = 2.0 * np.pi * np.outer(n, k) / N
    w = np.where((k == 0) | ((N % 2 == 0) & (k == N // 2)), 1.0, 2.0)
    valid_k = (k < K)[None, :]
    A = np.where(valid_k, np.cos(ang) * w[None, :] / N, 0.0)
    B = np.where(valid_k, -np.sin(ang) * w[None, :] / N, 0.0)
    return jnp.asarray(np.concatenate([A, B], axis=1), dtype=dtype)


# ----------------------------------------------------------------------------
# Wrappers (jitted so the layout plumbing fuses with the pallas_call)
# ----------------------------------------------------------------------------
@jax.jit
def rfft_module_forward(x):
    """RFFTModule(inverse=False): (B,F,T,D) -> (B,F,T//2+1,2*D), dtype preserved."""
    dtype = x.dtype
    B, F, T, D = x.shape
    K = T // 2 + 1
    M = B * F * D
    params = _gen_params()

    use_bf16 = ENABLE_BF16_FASTPATH and dtype == jnp.bfloat16
    cdtype = jnp.bfloat16 if use_bf16 else jnp.float32    # MXU streaming dtype
    sub = 16 if dtype == jnp.bfloat16 else 8               # output sublane packing

    tm = min(_round_up(M, 128), params["max_lane_tile"])
    M_pad = _round_up(M, tm)
    if T > params["max_contraction"]:
        # TODO(synk): the DFT matrix is re-read from HBM once per lane tile here;
        # a resident-weight manual pipeline / Cooley-Tukey split would remove it.
        tc = _CONTRACTION_TILE
    else:
        tc = _round_up(T, 128)          # pad single-chunk contraction to MXU tile
    T_pad = _round_up(T, tc)
    Kp = _round_up(K, sub)

    W = _rfft_weights(T, T_pad, Kp, cdtype)                # (2*Kp, T_pad)

    # (B,F,T,D) -> lane-dense (T, B*F*D) slab; pad fuses with the transpose.
    x2 = jnp.transpose(x, (2, 0, 1, 3)).reshape(T, M).astype(cdtype)
    if T_pad != T or M_pad != M:
        x2 = jnp.pad(x2, ((0, T_pad - T), (0, M_pad - M)))

    out = _dft_matmul(W, x2, 2 * Kp, dtype, tm, tc, params)   # (2*Kp, M_pad)

    # Interleave [re, im] per channel: matches torch.view_as_real(...).reshape.
    re = out[:K, :M].reshape(K, B, F, D)
    im = out[Kp:Kp + K, :M].reshape(K, B, F, D)
    y = jnp.stack([re, im], axis=-1)                       # (K,B,F,D,2)
    return jnp.transpose(y, (1, 2, 0, 3, 4)).reshape(B, F, K, 2 * D)


@partial(jax.jit, static_argnames=("time_dim",))
def rfft_module_inverse(x, time_dim):
    """RFFTModule(inverse=True): (B,F,K,D) -> (B,F,time_dim,D//2), dtype preserved."""
    dtype = x.dtype
    B, F, K, D = x.shape
    N = int(time_dim)
    Dh = D // 2
    # TODO(synk): general irfft frequency truncation / zero-padding (K != N//2+1)
    # is not handled; the SCNet pipeline always satisfies these constraints.
    assert D % 2 == 0 and K == N // 2 + 1
    M = B * F * Dh
    params = _gen_params()

    use_bf16 = ENABLE_BF16_FASTPATH and dtype == jnp.bfloat16
    cdtype = jnp.bfloat16 if use_bf16 else jnp.float32
    sub = 16 if dtype == jnp.bfloat16 else 8

    tm = min(_round_up(M, 128), params["max_lane_tile"])
    M_pad = _round_up(M, tm)
    if 2 * K > params["max_contraction"]:
        tc = _CONTRACTION_TILE
        K_pad = _round_up(K, tc)            # keeps 2*K_pad divisible by tc
    else:
        K_pad = _round_up(K, 128)
        tc = 2 * K_pad                      # single chunk over the stacked axis
    Np = _round_up(N, sub)

    W = _irfft_weights(N, Np, K, K_pad, cdtype)            # (Np, 2*K_pad)

    # De-interleave with a single transpose: (B,F,K,Dh,2) -> (2,K,B,F,Dh),
    # i.e. all real rows followed by all imaginary rows (no strided slices).
    xs = jnp.transpose(x.reshape(B, F, K, Dh, 2), (4, 2, 0, 1, 3)).astype(cdtype)
    if K_pad != K:
        xs = jnp.pad(xs, ((0, 0), (0, K_pad - K), (0, 0), (0, 0), (0, 0)))
    xs = xs.reshape(2 * K_pad, M)
    if M_pad != M:
        xs = jnp.pad(xs, ((0, 0), (0, M_pad - M)))

    out = _dft_matmul(W, xs, Np, dtype, tm, tc, params)    # (Np, M_pad)

    y = out[:N, :M].reshape(N, B, F, Dh)
    return jnp.transpose(y, (1, 2, 0, 3))                  # (B, F, N, Dh)


# ----------------------------------------------------------------------------
# Demo / self-check
# ----------------------------------------------------------------------------
if __name__ == "__main__":
    key = jax.random.PRNGKey(0)
    B, F, T, D = 2, 4, 16, 16
    x = jax.random.normal(key, (B, F, T, D), dtype=jnp.float32)

    # forward (inverse=False)
    y = jax.block_until_ready(rfft_module_forward(x))
    assert y.shape == (B, F, T // 2 + 1, 2 * D) and y.dtype == x.dtype

    # reference: jnp.fft.rfft along axis=2, view_as_real, reshape
    xr = jnp.fft.rfft(x.astype(jnp.float32), axis=2)
    ref = jnp.stack([jnp.real(xr), jnp.imag(xr)], axis=-1).reshape(
        B, F, T // 2 + 1, 2 * D)
    # Tolerance covers the MXU's default f32-matmul precision mode while still
    # catching any layout / frequency / scaling error (those would be O(1)).
    np.testing.assert_allclose(np.asarray(y), np.asarray(ref), rtol=2e-2, atol=2e-2)

    # inverse (inverse=True): round trip recovers x
    xb = jax.block_until_ready(rfft_module_inverse(y, time_dim=T))
    assert xb.shape == x.shape and xb.dtype == x.dtype
    np.testing.assert_allclose(np.asarray(xb), np.asarray(x), rtol=2e-2, atol=2e-2)

    print("KERNEL_OK")
</pallas_src>

<mosaic_0001>
module attributes {stable_mosaic.version = 11 : i64} {
  func.func @_dft_kernel_single(%arg0: i32, %arg1: i32, %arg2: memref<32x128xf32, #tpu.memory_space<vmem>>, %arg3: memref<128x128xf32, #tpu.memory_space<vmem>>, %arg4: memref<32x128xf32, #tpu.memory_space<vmem>>) attributes {dimension_semantics = [#tpu.dimension_semantics<parallel>, #tpu.dimension_semantics<arbitrary>], iteration_bounds = array<i64: 1, 1>, scalar_prefetch = 0 : i64, scratch_operands = 0 : i64, tpu.core_type = #tpu.core_type<tc>, window_params = [{pipeline_mode = #tpu.pipeline_mode<synchronous>, transform_indices = @transform_0, window_bounds = array<i64: 32, 128>}, {transform_indices = @transform_1, window_bounds = array<i64: 128, 128>}, {transform_indices = @transform_2, window_bounds = array<i64: 32, 128>}]} {
    %c0 = arith.constant 0 : index
    %c0_0 = arith.constant 0 : index
    %0 = vector.load %arg2[%c0, %c0_0] : memref<32x128xf32, #tpu.memory_space<vmem>>, vector<32x128xf32>
    %c0_1 = arith.constant 0 : index
    %c0_2 = arith.constant 0 : index
    %1 = vector.load %arg3[%c0_1, %c0_2] : memref<128x128xf32, #tpu.memory_space<vmem>>, vector<128x128xf32>
    %cst = arith.constant dense<0.000000e+00> : vector<32x128xf32>
    %2 = tpu.matmul %0, %1, %cst {dimension_numbers = #tpu.dot_dimension_numbers<[1], [0], [0], [1], [0, 0, 1, 1], [], []>} : vector<32x128xf32>, vector<128x128xf32>, vector<32x128xf32> -> vector<32x128xf32>
    %c0_3 = arith.constant 0 : index
    %c0_4 = arith.constant 0 : index
    %3 = vector.load %arg4[%c0_3, %c0_4] : memref<32x128xf32, #tpu.memory_space<vmem>>, vector<32x128xf32>
    tpu.vector_store %arg4[%c0_3, %c0_4], %2 {strides = array<i32>} : memref<32x128xf32, #tpu.memory_space<vmem>>, vector<32x128xf32>,
    return
  }
  func.func @transform_0(%arg0: i32, %arg1: i32) -> (i32, i32) {
    %c0_i32 = arith.constant 0 : i32
    %c0_i32_0 = arith.constant 0 : i32
    return %c0_i32, %arg1 : i32, i32
  }
  func.func @transform_1(%arg0: i32, %arg1: i32) -> (i32, i32) {
    %c0_i32 = arith.constant 0 : i32
    return %arg1, %arg0 : i32, i32
  }
  func.func @transform_2(%arg0: i32, %arg1: i32) -> (i32, i32) {
    %c0_i32 = arith.constant 0 : i32
    %c0_i32_0 = arith.constant 0 : i32
    return %c0_i32, %arg0 : i32, i32
  }
}

</mosaic_0001>

<llo_original>
// kernel: rfft_module_forward.1
$region0: #{rfft_module_forward.1}
  #allocation0 [shape = 'u32[]', space=smem, size = 0x4, offset = 0x4, fixed_abs, tag = 'smem constant byte address 0x4 - core index']
  #allocation1 [shape = 'u32[144,128]{1,0:T(1,128)}', space=vmem, size = 0x12000, scoped, tag = 'internal scratch']
  %s0 = inlined_call_operand.vmem [shape: f32[32,128], index: 0, kind: input, shape index: {}]
  %s1 = inlined_call_operand.vmem [shape: f32[128,128], index: 1, kind: input, shape index: {}]
  %s2 = inlined_call_operand.vmem [shape: f32[32,128], index: 2, kind: output, shape index: {}]
  %s3 = sld [smem:[#allocation0]]
  $region18: #{rfft_module_forward.1} parent=0
    _
  %s5 = ssub.s32 1, %s3
  %s6 = scalar_select 0, %s5, %s3
  // Predicated region
  $region2: #{rfft_module_forward.1} parent=0 // pred_check
    _
  $region3: #{rfft_module_forward.1} parent=0 // pred_check_branch
    %8 = sbr.rel (0) target = $region5
  $region4: #{rfft_module_forward.1} parent=0 // pred_region
    _
  $region5: #{rfft_module_forward.1} parent=0 // pred_fallthru
    _
  // Predicated region
  $region6: #{rfft_module_forward.1} parent=0 // pred_check
    _
  $region7: #{rfft_module_forward.1} parent=0 // pred_check_branch
    %10 = sbr.rel (0) target = $region9
  $region8: #{rfft_module_forward.1} parent=0 // pred_region
    _
  $region9: #{rfft_module_forward.1} parent=0 // pred_fallthru
    _
  %v11 = vld [vmem:[%s0] sm:$0xff]
  %v12 = vld [vmem:[%s0 + $0x8] sm:$0xff]
  %v13 = vld [vmem:[%s0 + $0x10] sm:$0xff]
  %v14 = vld [vmem:[%s0 + $0x18] sm:$0xff]
  %v15 = vld [vmem:[%s1] sm:$0xff]
  %v16 = vld [vmem:[%s1 + $0x8] sm:$0xff]
  %v17 = vld [vmem:[%s1 + $0x10] sm:$0xff]
  %v18 = vld [vmem:[%s1 + $0x18] sm:$0xff]
  %v19 = vld [vmem:[%s1 + $0x20] sm:$0xff]
  %v20 = vld [vmem:[%s1 + $0x28] sm:$0xff]
  %v21 = vld [vmem:[%s1 + $0x30] sm:$0xff]
  %v22 = vld [vmem:[%s1 + $0x38] sm:$0xff]
  %v23 = vld [vmem:[%s1 + $0x40] sm:$0xff]
  %v24 = vld [vmem:[%s1 + $0x48] sm:$0xff]
  %v25 = vld [vmem:[%s1 + $0x50] sm:$0xff]
  %v26 = vld [vmem:[%s1 + $0x58] sm:$0xff]
  %v27 = vld [vmem:[%s1 + $0x60] sm:$0xff]
  %v28 = vld [vmem:[%s1 + $0x68] sm:$0xff]
  %v29 = vld [vmem:[%s1 + $0x70] sm:$0xff]
  %v30 = vld [vmem:[%s1 + $0x78] sm:$0xff]
  %31 = vmatprep.subr.mxu0 0.0
  %32 = vmatpush1.msra.mxu0 %v30
  %33 = vmatprep.subr.mxu0 0.0
  %34 = vmatpush1.msra.mxu0 %v29
  %35 = vmatprep.subr.mxu0 0.0
  %36 = vmatpush1.msra.mxu0 %v28
  %37 = vmatprep.subr.mxu0 0.0
  %38 = vmatpush1.msra.mxu0 %v27
  %39 = vmatprep.subr.mxu0 0.0
  %40 = vmatpush1.msra.mxu0 %v26
  %41 = vmatprep.subr.mxu0 0.0
  %42 = vmatpush1.msra.mxu0 %v25
  %43 = vmatprep.subr.mxu0 0.0
  %44 = vmatpush1.msra.mxu0 %v24
  %45 = vmatprep.subr.mxu0 0.0
  %46 = vmatpush1.msra.mxu0 %v23
  %47 = vmatprep.subr.mxu0 0.0
  %48 = vmatpush1.msra.mxu0 %v22
  %49 = vmatprep.subr.mxu0 0.0
  %50 = vmatpush1.msra.mxu0 %v21
  %51 = vmatprep.subr.mxu0 0.0
  %52 = vmatpush1.msra.mxu0 %v20
  %53 = vmatprep.subr.mxu0 0.0
  %54 = vmatpush1.msra.mxu0 %v19
  %55 = vmatprep.subr.mxu0 0.0
  %56 = vmatpush1.msra.mxu0 %v18
  %57 = vmatprep.subr.mxu0 0.0
  %58 = vmatpush1.msra.mxu0 %v17
  %59 = vmatprep.subr.mxu0 0.0
  %60 = vmatpush1.msra.mxu0 %v16
  %61 = vmatprep.subr.mxu0 0.0
  %62 = vmatpush1.msra.mxu0 %v15
  %63 = vmatprep.subr.mxu0 0.0
  %64 = vmatpush2.msra.mxu0 0.0
  %65 = vmatprep.subr.mxu0 0.0
  %66 = vmatpush2.msra.mxu0 0.0
  %67 = vmatprep.subr.mxu0 0.0
  %68 = vmatpush2.msra.mxu0 0.0
  %69 = vmatprep.subr.mxu0 0.0
  %70 = vmatpush2.msra.mxu0 0.0
  %71 = vmatprep.subr.mxu0 0.0
  %72 = vmatpush2.msra.mxu0 0.0
  %73 = vmatprep.subr.mxu0 0.0
  %74 = vmatpush2.msra.mxu0 0.0
  %75 = vmatprep.subr.mxu0 0.0
  %76 = vmatpush2.msra.mxu0 0.0
  %77 = vmatprep.subr.mxu0 0.0
  %78 = vmatpush2.msra.mxu0 0.0
  %79 = vmatprep.subr.mxu0 0.0
  %80 = vmatpush2.msra.mxu0 0.0
  %81 = vmatprep.subr.mxu0 0.0
  %82 = vmatpush2.msra.mxu0 0.0
  %83 = vmatprep.subr.mxu0 0.0
  %84 = vmatpush2.msra.mxu0 0.0
  %85 = vmatprep.subr.mxu0 0.0
  %86 = vmatpush2.msra.mxu0 0.0
  %87 = vmatprep.subr.mxu0 0.0
  %88 = vmatpush2.msra.mxu0 0.0
  %89 = vmatprep.subr.mxu0 0.0
  %90 = vmatpush2.msra.mxu0 0.0
  %91 = vmatprep.subr.mxu0 0.0
  %92 = vmatpush2.msra.mxu0 0.0
  %93 = vmatprep.subr.mxu0 0.0
  %94 = vmatpush2.msra.mxu0 0.0
  %95 = vmatprep.mubr.f32.mxu0 0.0
  %96 = vmatmul.mubr.f32.gmra.mxu0 %v11
  %v97 = vpop.f32.mrf.mxu0
  %v98 = vadd.f32 0.0, %v97
  %v99 = vpop.f32.mrf.mxu0
  %100 = vmatprep.mubr.f32.mxu0 0.0
  %101 = vmatmul.mubr.f32.gmra.mxu0 %v12
  %v102 = vpop.f32.mrf.mxu0
  %v103 = vadd.f32 0.0, %v102
  %v104 = vpop.f32.mrf.mxu0
  %105 = vmatprep.mubr.f32.mxu0 0.0
  %106 = vmatmul.mubr.f32.gmra.mxu0 %v13
  %v107 = vpop.f32.mrf.mxu0
  %v108 = vadd.f32 0.0, %v107
  %v109 = vpop.f32.mrf.mxu0
  %110 = vmatprep.mubr.f32.mxu0 0.0
  %111 = vmatmul.mubr.f32.gmra.mxu0 %v14
  %v112 = vpop.f32.mrf.mxu0
  %v113 = vadd.f32 0.0, %v112
  %v114 = vpop.f32.mrf.mxu0
  %115 = vdwg.mxu0
  %116 = vst [vmem:[%s2] sm:$0xff] %v98
  %117 = vst [vmem:[%s2 + $0x8] sm:$0xff] %v103
  %118 = vst [vmem:[%s2 + $0x10] sm:$0xff] %v108
  %119 = vst [vmem:[%s2 + $0x18] sm:$0xff] %v113
  // Predicated region
  $region10: #{rfft_module_forward.1} parent=0 // pred_check
    _
  $region11: #{rfft_module_forward.1} parent=0 // pred_check_branch
    %121 = sbr.rel (0) target = $region13
  $region12: #{rfft_module_forward.1} parent=0 // pred_region
    _
  $region13: #{rfft_module_forward.1} parent=0 // pred_fallthru
    _
  // Predicated region
  $region14: #{rfft_module_forward.1} parent=0 // pred_check
    _
  $region15: #{rfft_module_forward.1} parent=0 // pred_check_branch
    %123 = sbr.rel (0) target = $region17
  $region16: #{rfft_module_forward.1} parent=0 // pred_region
    _
  $region17: #{rfft_module_forward.1} parent=0 // pred_fallthru
    _

</llo_original>
